<compile_context>
chip_gen: v7x
topology: tpu7x:2x2x1
jax: 0.10.0
libtpu: 0.0.40
codegen_flags: <defaults>
</compile_context>

<pallas_src>
import functools

import jax
import jax.numpy as jnp
from jax.experimental import pallas as pl
from jax.experimental.pallas import tpu as pltpu

MXU_DTYPE = jnp.bfloat16          # MXU operand dtype; accumulation is always f32
KERNEL, STRIDE, PAD = 4, 2, 2     # Conv2d(kernel=4, stride=2, padding=2)

RECEPTIVE_FIELDS = {(28, 28): 128 * 5 * 5, (64, 64): 128 * 9 * 9}


def _round_up(x: int, m: int) -> int:
    return ((x + m - 1) // m) * m


def _cdiv(a: int, b: int) -> int:
    return (a + b - 1) // b


# ---------------------------------------------------------------------------
# GEMM kernels: y = act(x @ w + b)
# ---------------------------------------------------------------------------
def _gemm_bias_act_kernel(x_ref, w_ref, b_ref, o_ref, *, act):
    # Single-K-step fast path: no scratch accumulator, no zero-fill.
    y = jnp.dot(x_ref[...], w_ref[...], preferred_element_type=jnp.float32)
    y = y + b_ref[...]                      # (1, tn) bias broadcasts over rows
    if act == "relu":
        y = jnp.maximum(y, 0.0)
    o_ref[...] = y.astype(o_ref.dtype)


def _gemm_bias_act_acc_kernel(x_ref, w_ref, b_ref, o_ref, acc_ref, *, act):
    # Multi-K-step path (kept for generality; unused at these shapes).
    k = pl.program_id(2)
    prod = jnp.dot(x_ref[...], w_ref[...], preferred_element_type=jnp.float32)

    @pl.when(k == 0)
    def _():
        acc_ref[...] = prod                 # init with first product (no zero store)

    @pl.when(k > 0)
    def _():
        acc_ref[...] += prod

    @pl.when(k == pl.num_programs(2) - 1)
    def _():
        y = acc_ref[...] + b_ref[...]
        if act == "relu":
            y = jnp.maximum(y, 0.0)
        o_ref[...] = y.astype(o_ref.dtype)


# ---------------------------------------------------------------------------
# Per-layer GEMM "plan": weights padded / reshaped / cast ONCE at init.
# ---------------------------------------------------------------------------
def make_gemm_plan(w, b, *, act, out_dtype, tk_cap=4096, tn_cap=256):
    """w: (K, N) f32, b: (N,) f32 -> dict with padded bf16 weight, f32 bias."""
    K, N = w.shape
    tk = min(tk_cap, _round_up(K, 128))     # full K in one step whenever it fits
    tn = min(tn_cap, _round_up(N, 128))
    Kp, Np = _round_up(K, tk), _round_up(N, tn)
    wp = jnp.pad(w, ((0, Kp - K), (0, Np - N))).astype(MXU_DTYPE)
    bp = jnp.pad(b, (0, Np - N)).reshape(1, Np).astype(jnp.float32)
    return dict(w=wp, b=bp, K=K, N=N, Kp=Kp, Np=Np, tk=tk, tn=tn,
                act=act, out_dtype=out_dtype)


def fused_linear(plan, x, *, tm_cap=256):
    """act(x @ w + b) with pre-padded weights; x: (M, K) -> (M, N)."""
    M, K = x.shape
    assert K == plan["K"]
    Kp, Np, tk, tn = plan["Kp"], plan["Np"], plan["tk"], plan["tn"]

    tm = min(tm_cap, _round_up(M, 8))
    # Megacore: aim for >=2 parallel output blocks so both v7x TCs get work.
    if _cdiv(M, tm) * (Np // tn) < 2:
        if tm > 8:
            tm = max(8, _round_up(tm // 2, 8))
        elif tn > 128:
            tn //= 2
    Mp = _round_up(M, tm)

    xp = x.astype(MXU_DTYPE)
    if (Mp, Kp) != (M, K):
        xp = jnp.pad(xp, ((0, Mp - M), (0, Kp - K)))

    nm, nn, nk = Mp // tm, Np // tn, Kp // tk
    act = plan["act"]

    if nk == 1:
        out = pl.pallas_call(
            functools.partial(_gemm_bias_act_kernel, act=act),
            out_shape=jax.ShapeDtypeStruct((Mp, Np), plan["out_dtype"]),
            grid=(nm, nn),
            in_specs=[
                pl.BlockSpec((tm, Kp), lambda i, j: (i, 0)),
                pl.BlockSpec((Kp, tn), lambda i, j: (0, j)),
                pl.BlockSpec((1, tn), lambda i, j: (0, j)),
            ],
            out_specs=pl.BlockSpec((tm, tn), lambda i, j: (i, j)),
            compiler_params=pltpu.CompilerParams(
                dimension_semantics=("parallel", "parallel")),
        )(xp, plan["w"], plan["b"])
    else:
        out = pl.pallas_call(
            functools.partial(_gemm_bias_act_acc_kernel, act=act),
            out_shape=jax.ShapeDtypeStruct((Mp, Np), plan["out_dtype"]),
            grid=(nm, nn, nk),
            in_specs=[
                pl.BlockSpec((tm, tk), lambda i, j, k: (i, k)),
                pl.BlockSpec((tk, tn), lambda i, j, k: (k, j)),
                pl.BlockSpec((1, tn), lambda i, j, k: (0, j)),
            ],
            out_specs=pl.BlockSpec((tm, tn), lambda i, j, k: (i, j)),
            scratch_shapes=[pltpu.VMEM((tm, tn), jnp.float32)],
            compiler_params=pltpu.CompilerParams(
                dimension_semantics=("parallel", "parallel", "arbitrary")),
        )(xp, plan["w"], plan["b"])

    return out[:M, :plan["N"]]


# ---------------------------------------------------------------------------
# Conv2d(k=4, s=2, p=2) + ReLU as im2col + fused Pallas GEMM
# ---------------------------------------------------------------------------
def conv2d_relu(plan, x_nhwc):
    B, H, W, C = x_nhwc.shape
    Ho = (H + 2 * PAD - KERNEL) // STRIDE + 1
    Wo = (W + 2 * PAD - KERNEL) // STRIDE + 1

    xp = jnp.pad(x_nhwc, ((0, 0), (PAD, PAD), (PAD, PAD), (0, 0)))
    # TODO(synk): fuse this im2col into the Pallas kernel (in-kernel strided
    # windows over the padded NHWC activation) to avoid the 16x HBM expansion.
    cols = [xp[:, di:di + STRIDE * Ho:STRIDE, dj:dj + STRIDE * Wo:STRIDE, :]
            for di in range(KERNEL) for dj in range(KERNEL)]
    patches = jnp.concatenate(cols, axis=-1)                 # (B, Ho, Wo, 16*C)
    patches = patches.reshape(B * Ho * Wo, KERNEL * KERNEL * C)

    y = fused_linear(plan, patches)                          # bf16, ReLU applied
    return y.reshape(B, Ho, Wo, plan["N"])


# ---------------------------------------------------------------------------
# Fused MLP head: hidden fcs (ReLU) + fc_out in ONE pallas_call,
# all weights resident in VMEM (M = batch, launch/latency bound otherwise).
# ---------------------------------------------------------------------------
def _mlp_head_kernel(*refs, n_hidden):
    n_layers = n_hidden + 1
    x_ref = refs[0]
    wb = refs[1:1 + 2 * n_layers]
    outs = refs[1 + 2 * n_layers:]

    h = x_ref[...]                                           # (Mp, Kp) bf16
    for l in range(n_hidden):
        w_ref, b_ref = wb[2 * l], wb[2 * l + 1]
        y = jnp.dot(h, w_ref[...], preferred_element_type=jnp.float32) + b_ref[...]
        y = jnp.maximum(y, 0.0)
        h = y.astype(MXU_DTYPE)
        outs[l][...] = h
    w_ref, b_ref = wb[2 * n_hidden], wb[2 * n_hidden + 1]
    z = jnp.dot(h, w_ref[...], preferred_element_type=jnp.float32) + b_ref[...]
    outs[n_hidden][...] = z.astype(outs[n_hidden].dtype)


def mlp_head(plans, x):
    """plans: [hidden fcs..., fc_out]; x: (M, K0). Returns (z, [hidden acts])."""
    M, K = x.shape
    n_hidden = len(plans) - 1
    assert K == plans[0]["K"]
    Mp = _round_up(M, 8)
    K0p = plans[0]["Kp"]

    xp = x.astype(MXU_DTYPE)
    if (Mp, K0p) != (M, K):
        xp = jnp.pad(xp, ((0, Mp - M), (0, K0p - K)))

    operands = [xp]
    in_specs = [pl.BlockSpec((Mp, K0p), lambda i: (0, 0))]
    for p in plans:
        operands += [p["w"], p["b"]]
        in_specs += [pl.BlockSpec(p["w"].shape, lambda i: (0, 0)),
                     pl.BlockSpec(p["b"].shape, lambda i: (0, 0))]

    out_shape = tuple(
        [jax.ShapeDtypeStruct((Mp, p["Np"]), MXU_DTYPE) for p in plans[:-1]]
        + [jax.ShapeDtypeStruct((Mp, plans[-1]["Np"]), jnp.float32)])
    out_specs = tuple(pl.BlockSpec((Mp, p["Np"]), lambda i: (0, 0)) for p in plans)

    outs = pl.pallas_call(
        functools.partial(_mlp_head_kernel, n_hidden=n_hidden),
        out_shape=out_shape,
        grid=(1,),
        in_specs=in_specs,
        out_specs=out_specs,
        compiler_params=pltpu.CompilerParams(dimension_semantics=("arbitrary",)),
    )(*operands)

    hidden = [o[:M, :p["N"]] for o, p in zip(outs[:-1], plans[:-1])]
    z = outs[-1][:M, :plans[-1]["N"]]
    return z, hidden


# ---------------------------------------------------------------------------
# Parameter construction (deterministic, synthetic, PyTorch-style init)
# ---------------------------------------------------------------------------
def make_conv_encoder_params(key, width, depth, latent_size, img_size):
    c_in = img_size[0]
    conv_channels = [c_in, 32, 64, 128]
    receptive_field = RECEPTIVE_FIELDS[tuple(img_size[1:])]

    def uniform(k, shape, bound):
        return jax.random.uniform(k, shape, jnp.float32, -bound, bound)

    fc_widths = [receptive_field] + [width] * (depth - 1) + [latent_size]
    n_conv = len(conv_channels) - 1
    n_fc = len(fc_widths) - 1
    keys = jax.random.split(key, 2 * (n_conv + n_fc))
    kit = iter(keys)

    conv_plans = []
    for cin, cout in zip(conv_channels[:-1], conv_channels[1:]):
        bound = 1.0 / (cin * KERNEL * KERNEL) ** 0.5
        w = uniform(next(kit), (KERNEL, KERNEL, cin, cout), bound)   # HWIO
        b = uniform(next(kit), (cout,), bound)
        # (di, dj, c) flattening order matches the im2col concatenation order.
        conv_plans.append(make_gemm_plan(
            w.reshape(KERNEL * KERNEL * cin, cout), b,
            act="relu", out_dtype=MXU_DTYPE))

    head_plans = []
    for idx, (din, dout) in enumerate(zip(fc_widths[:-1], fc_widths[1:])):
        bound = 1.0 / din ** 0.5
        w = uniform(next(kit), (din, dout), bound)                    # (in, out)
        b = uniform(next(kit), (dout,), bound)
        last = idx == n_fc - 1
        head_plans.append(make_gemm_plan(
            w, b, act=("none" if last else "relu"),
            out_dtype=(jnp.float32 if last else MXU_DTYPE)))

    return dict(conv_plans=conv_plans, head_plans=head_plans)


# ---------------------------------------------------------------------------
# ConvEncoder forward (mirrors ConvEncoder.forward: returns (z, activations))
# ---------------------------------------------------------------------------
def conv_encoder_forward(params, x_nchw):
    a = []
    h = jnp.transpose(x_nchw, (0, 2, 3, 1)).astype(MXU_DTYPE)   # NCHW -> NHWC, bf16
    for plan in params["conv_plans"]:
        h = conv2d_relu(plan, h)
        a.append(jnp.transpose(h, (0, 3, 1, 2)))                 # report NCHW like torch

    B = h.shape[0]
    h = jnp.transpose(h, (0, 3, 1, 2)).reshape(B, -1)            # Flatten in C,H,W order

    z, hidden = mlp_head(params["head_plans"], h)
    a.extend(hidden)
    return z, a


# ---------------------------------------------------------------------------
if __name__ == "__main__":
    width = 32
    depth = 2                 # one hidden fc (ReLU) + fc_out
    latent_size = 10
    img_size = (1, 28, 28)    # (C, H, W), NCHW input like the PyTorch module
    batch = 2

    key = jax.random.PRNGKey(0)
    kp, kx = jax.random.split(key)

    params = make_conv_encoder_params(kp, width, depth, latent_size, img_size)
    x = jax.random.normal(kx, (batch, *img_size), jnp.float32)

    z, acts = conv_encoder_forward(params, x)
    jax.block_until_ready(z)
    for t in acts:
        jax.block_until_ready(t)

    assert z.shape == (batch, latent_size)
    assert z.dtype == jnp.float32
    assert len(acts) == 3 + (depth - 1)
    assert acts[0].shape == (batch, 32, 15, 15)
    assert acts[1].shape == (batch, 64, 8, 8)
    assert acts[2].shape == (batch, 128, 5, 5)
    assert acts[3].shape == (batch, width)

    print("KERNEL_OK")
</pallas_src>

<mosaic_0001>
module attributes {stable_mosaic.version = 11 : i64} {
  func.func @_gemm_bias_act_kernel(%arg0: i32, %arg1: i32, %arg2: memref<256x128xbf16, #tpu.memory_space<vmem>>, %arg3: memref<128x128xbf16, #tpu.memory_space<vmem>>, %arg4: memref<1x128xf32, #tpu.memory_space<vmem>>, %arg5: memref<256x128xbf16, #tpu.memory_space<vmem>>) attributes {dimension_semantics = [#tpu.dimension_semantics<parallel>, #tpu.dimension_semantics<parallel>], iteration_bounds = array<i64: 2, 1>, scalar_prefetch = 0 : i64, scratch_operands = 0 : i64, tpu.core_type = #tpu.core_type<tc>, window_params = [{transform_indices = @transform_0, window_bounds = array<i64: 256, 128>}, {transform_indices = @transform_1, window_bounds = array<i64: 128, 128>}, {transform_indices = @transform_2, window_bounds = array<i64: 1, 128>}, {transform_indices = @transform_3, window_bounds = array<i64: 256, 128>}]} {
    %c0 = arith.constant 0 : index
    %c0_0 = arith.constant 0 : index
    %0 = vector.load %arg2[%c0, %c0_0] : memref<256x128xbf16, #tpu.memory_space<vmem>>, vector<256x128xbf16>
    %c0_1 = arith.constant 0 : index
    %c0_2 = arith.constant 0 : index
    %1 = vector.load %arg3[%c0_1, %c0_2] : memref<128x128xbf16, #tpu.memory_space<vmem>>, vector<128x128xbf16>
    %cst = arith.constant dense<0.000000e+00> : vector<256x128xf32>
    %2 = tpu.matmul %0, %1, %cst {dimension_numbers = #tpu.dot_dimension_numbers<[1], [0], [0], [1], [0, 0, 1, 1], [], []>} : vector<256x128xbf16>, vector<128x128xbf16>, vector<256x128xf32> -> vector<256x128xf32>
    %c0_3 = arith.constant 0 : index
    %c0_4 = arith.constant 0 : index
    %3 = vector.load %arg4[%c0_3, %c0_4] : memref<1x128xf32, #tpu.memory_space<vmem>>, vector<1x128xf32>
    %4 = vector.broadcast %3 : vector<1x128xf32> to vector<256x128xf32>
    %5 = arith.addf %2, %4 : vector<256x128xf32>
    %cst_5 = arith.constant 0.000000e+00 : f32
    %6 = vector.broadcast %cst_5 : f32 to vector<256x128xf32>
    %7 = arith.maximumf %5, %6 : vector<256x128xf32>
    %8 = arith.truncf %7 : vector<256x128xf32> to vector<256x128xbf16>
    %c0_6 = arith.constant 0 : index
    %c0_7 = arith.constant 0 : index
    %9 = vector.load %arg5[%c0_6, %c0_7] : memref<256x128xbf16, #tpu.memory_space<vmem>>, vector<256x128xbf16>
    tpu.vector_store %arg5[%c0_6, %c0_7], %8 {strides = array<i32>} : memref<256x128xbf16, #tpu.memory_space<vmem>>, vector<256x128xbf16>,
    return
  }
  func.func @transform_0(%arg0: i32, %arg1: i32) -> (i32, i32) {
    %c0_i32 = arith.constant 0 : i32
    %c0_i32_0 = arith.constant 0 : i32
    return %arg0, %c0_i32 : i32, i32
  }
  func.func @transform_1(%arg0: i32, %arg1: i32) -> (i32, i32) {
    %c0_i32 = arith.constant 0 : i32
    %c0_i32_0 = arith.constant 0 : i32
    return %c0_i32, %arg1 : i32, i32
  }
  func.func @transform_2(%arg0: i32, %arg1: i32) -> (i32, i32) {
    %c0_i32 = arith.constant 0 : i32
    %c0_i32_0 = arith.constant 0 : i32
    return %c0_i32, %arg1 : i32, i32
  }
  func.func @transform_3(%arg0: i32, %arg1: i32) -> (i32, i32) {
    %c0_i32 = arith.constant 0 : i32
    return %arg0, %arg1 : i32, i32
  }
}

</mosaic_0001>

<llo_original>
// kernel: tpu_custom_call.1
$region0: #{tpu_custom_call.1}
  #allocation0 [shape = 'u32[]', space=smem, size = 0x4, offset = 0x4, fixed_abs, tag = 'smem constant byte address 0x4 - core index']
  #allocation1 [shape = 'u32[144,128]{1,0:T(1,128)}', space=vmem, size = 0x12000, scoped, tag = 'internal scratch']
  %s0 = inlined_call_operand.hbm [shape: bf16[512,128], index: 0, kind: input, shape index: {}]
  %s1 = inlined_call_operand.hbm [shape: bf16[128,128], index: 1, kind: input, shape index: {}]
  %s2 = inlined_call_operand.vmem [shape: f32[1,128], index: 2, kind: input, shape index: {}]
  %s3 = inlined_call_operand.hbm [shape: bf16[512,128], index: 3, kind: output, shape index: {}]
  %s4 = sld [smem:[#allocation0]]
  $region53: #{tpu_custom_call.1} parent=0
    _
  %s6 = ssub.s32 1, %s4
  %s7 = scalar_select 0, %s6, %s4
  $region1: #{tpu_custom_call.1} parent=0
    #allocation2 [shape = 'u8[131072]{0}', space=vmem, size = 0x20000, scoped, tag = 'input window, operand 0']
    #allocation3 [shape = 's32[2]{0}', space=sflag, size = 0x8, scoped, tag = 'scoped memory for tpu_custom_call.1']
    #allocation4 [shape = 's32[2]{0}', space=sflag, size = 0x8, scoped, tag = 'scoped memory for tpu_custom_call.1']
    #allocation5 [shape = 'u8[32768]{0}', space=vmem, size = 0x8000, scoped, tag = 'input window, operand 1, single buffered']
    #allocation6 [shape = 's32[1]{0}', space=sflag, size = 0x4, scoped, tag = 'scoped memory for tpu_custom_call.1']
    #allocation7 [shape = 'u8[131072]{0}', space=vmem, size = 0x20000, scoped, tag = 'output window, operand 0']
    %8 = vsyncpa [#allocation3], 0
    %s9 = scalar_lea.sflag [#allocation3], 1
    %10 = vsyncpa %s9, 0
    %11 = vsyncpa [#allocation6], 0
    %12 = vsyncpa [#allocation4], 0
    %s13 = scalar_lea.sflag [#allocation4], 1
    %14 = vsyncpa %s13, 0
    loop: start=0, step=1, limit=4
    $region2: #{tpu_custom_call.1} parent=1 // loop_pre_header
      _
    $region3: #{tpu_custom_call.1} parent=1 // loop_header
      %s16 = sphi 0, %s20
      %p17 = scmp.ge.s32.totalorder %s16, 4
      %s23 = sphi 0, %s35
      %s24 = sphi 0, %s31
      %s25 = sphi 0, %s23
      %s26 = sphi 0, %s24
      %s27 = sphi 0, %s25
      %s28 = sphi 0, %s26
      %s38 = sphi 0, %s40
      %s41 = sphi 0, %s38
      %s42 = sphi 0, %s41
      %s58 = sphi 0, %s42
      %s64 = sphi 0, %s66
      %s67 = sphi 0, %s64
      %s68 = sphi 0, %s67
      %s84 = sphi 0, %s68
      %s90 = sphi 0, %s92
      %s93 = sphi 0, %s90
      %s94 = sphi 0, %s93
      %s110 = sphi 0, %s94
      %s118 = sphi 0, %s120
      %s121 = sphi 0, %s118
      %s122 = sphi 0, %s121
      %s138 = sphi 0, %s122
    $region4: #{tpu_custom_call.1} parent=1 // loop_header_branch
      %19 = sbr.rel (%p17) target = $region8
    $region5: #{tpu_custom_call.1} parent=1 // loop_body
      %s21 = ssub.s32 %s16, 1
      %s22 = ssub.s32 %s16, 2
      %s29 = sadd.s32 1, %s24
      %p30 = scmp.ge.s32.totalorder %s29, 1
      %s31 = scalar_select %p30, 0, %s29
      %s32 = sadd.s32 1, %s23
      %s33 = scalar_select %p30, %s32, %s23
      %p34 = scmp.ge.s32.totalorder %s33, 2
      %s35 = scalar_select %p34, 0, %s33
      %s36 = ssub.s32 %s23, %s35
      %p37 = scmp.eq.s32.totalorder %s36, 0
      %s39 = sadd.s32 %s38, 1
      %s40 = scalar_select %p37, %s38, %s39
      %p43 = pneg %p37
      %p44 = scmp.eq.s32.totalorder %s16, 1
      %p45 = por %p43, %p44
      %p46 = scmp.ne.s32.totalorder %s38, %s41
      %p47 = scmp.eq.s32.totalorder %s16, 0
      %p48 = por %p46, %p47
      %p49 = scmp.ne.s32.totalorder %s38, %s41
      %p50 = scmp.eq.s32.totalorder %s21, 1
      %p51 = por %p49, %p50
      %p52 = scmp.ne.s32.totalorder %s41, %s42
      %p53 = scmp.eq.s32.totalorder %s21, 0
      %p54 = por %p52, %p53
      %p55 = scmp.ne.s32.totalorder %s41, %s42
      %p56 = scmp.eq.s32.totalorder %s22, 1
      %p57 = por %p55, %p56
      %p59 = scmp.ne.s32.totalorder %s42, %s58
      %p60 = scmp.eq.s32.totalorder %s22, 0
      %p61 = por %p59, %p60
      %s62 = ssub.s32 %s24, %s31
      %p63 = scmp.eq.s32.totalorder %s62, 0
      %s65 = sadd.s32 %s64, 1
      %s66 = scalar_select %p63, %s64, %s65
      %p69 = pneg %p63
      %p70 = scmp.eq.s32.totalorder %s16, 1
      %p71 = por %p69, %p70
      %p72 = scmp.ne.s32.totalorder %s64, %s67
      %p73 = scmp.eq.s32.totalorder %s16, 0
      %p74 = por %p72, %p73
      %p75 = scmp.ne.s32.totalorder %s64, %s67
      %p76 = scmp.eq.s32.totalorder %s21, 1
      %p77 = por %p75, %p76
      %p78 = scmp.ne.s32.totalorder %s67, %s68
      %p79 = scmp.eq.s32.totalorder %s21, 0
      %p80 = por %p78, %p79
      %p81 = scmp.ne.s32.totalorder %s67, %s68
      %p82 = scmp.eq.s32.totalorder %s22, 1
      %p83 = por %p81, %p82
      %p85 = scmp.ne.s32.totalorder %s68, %s84
      %p86 = scmp.eq.s32.totalorder %s22, 0
      %p87 = por %p85, %p86
      %s88 = ssub.s32 %s24, %s31
      %p89 = scmp.eq.s32.totalorder %s88, 0
      %s91 = sadd.s32 %s90, 1
      %s92 = scalar_select %p89, %s90, %s91
      %p95 = pneg %p89
      %p96 = scmp.eq.s32.totalorder %s16, 1
      %p97 = por %p95, %p96
      %p98 = scmp.ne.s32.totalorder %s90, %s93
      %p99 = scmp.eq.s32.totalorder %s16, 0
      %p100 = por %p98, %p99
      %p101 = scmp.ne.s32.totalorder %s90, %s93
      %p102 = scmp.eq.s32.totalorder %s21, 1
      %p103 = por %p101, %p102
      %p104 = scmp.ne.s32.totalorder %s93, %s94
      %p105 = scmp.eq.s32.totalorder %s21, 0
      %p106 = por %p104, %p105
      %p107 = scmp.ne.s32.totalorder %s93, %s94
      %p108 = scmp.eq.s32.totalorder %s22, 1
      %p109 = por %p107, %p108
      %p111 = scmp.ne.s32.totalorder %s94, %s110
      %p112 = scmp.eq.s32.totalorder %s22, 0
      %p113 = por %p111, %p112
      %s114 = ssub.s32 %s23, %s35
      %s115 = ssub.s32 %s24, %s31
      %s116 = sor.u32 %s114, %s115
      %p117 = scmp.eq.s32.totalorder %s116, 0
      %s119 = sadd.s32 %s118, 1
      %s120 = scalar_select %p117, %s118, %s119
      %p123 = pneg %p117
      %p124 = scmp.eq.s32.totalorder %s16, 1
      %p125 = por %p123, %p124
      %p126 = scmp.ne.s32.totalorder %s118, %s121
      %p127 = scmp.eq.s32.totalorder %s16, 0
      %p128 = por %p126, %p127
      %p129 = scmp.ne.s32.totalorder %s118, %s121
      %p130 = scmp.eq.s32.totalorder %s21, 1
      %p131 = por %p129, %p130
      %p132 = scmp.ne.s32.totalorder %s121, %s122
      %p133 = scmp.eq.s32.totalorder %s21, 0
      %p134 = por %p132, %p133
      %p135 = scmp.ne.s32.totalorder %s121, %s122
      %p136 = scmp.eq.s32.totalorder %s22, 1
      %p137 = por %p135, %p136
      %p139 = scmp.ne.s32.totalorder %s122, %s138
      %p140 = scmp.eq.s32.totalorder %s22, 0
      %p141 = por %p139, %p140
      %p142 = scmp.le.s32.totalorder 1, %s16
      %p143 = scmp.lt.s32.totalorder %s16, 3
      %p144 = pnand %p142, %p143
      %p145 = pneg %p144
      // Predicated region
      $region9: #{tpu_custom_call.1} parent=5 // pred_check
        _
      $region10: #{tpu_custom_call.1} parent=5 // pred_check_branch
        %147 = sbr.rel (%p144) target = $region12
      $region11: #{tpu_custom_call.1} parent=5 // pred_region
        %s148 = ssub.s32 %s16, 1
        // Predicated region
        $region13: #{tpu_custom_call.1} parent=11 // pred_check
          %p149 = pneg %p80
        $region14: #{tpu_custom_call.1} parent=11 // pred_check_branch
          %151 = sbr.rel (%p149) target = $region16
        $region15: #{tpu_custom_call.1} parent=11 // pred_region
          %s153 = ssub.s32 1024, 1024
          %154 = vsyncadd [#allocation6], %s153
          %s155 = smul.addr %s26, 64
          %s156 = scalar_lea.hbm %s1, %s155
          %s157 = sshll.u32 [#allocation5], 4
          %s158 = int_to_ptr.vmem [resolvable:$true] %s157
          %163 = dma.hbm_to_vmem [thread:$0]  %s156, 1024, %s158, [#allocation6], 64, 64, 4
        $region16: #{tpu_custom_call.1} parent=11 // pred_fallthru
          _
        // Predicated region
        $region17: #{tpu_custom_call.1} parent=11 // pred_check
          %p164 = pneg %p106
        $region18: #{tpu_custom_call.1} parent=11 // pred_check_branch
          %166 = sbr.rel (%p164) target = $region20
        $region19: #{tpu_custom_call.1} parent=11 // pred_region
          %p167 = scmp.lt.s32.totalorder %s26, 0
          %s168 = scalar_select %p167, %s26, 0
          %s169 = scalar_lea.vmem %s2, %s168
        $region20: #{tpu_custom_call.1} parent=11 // pred_fallthru
          _
      $region12: #{tpu_custom_call.1} parent=5 // pred_fallthru
        _
      %p170 = scmp.lt.s32.totalorder %s16, 2
      // Predicated region
      $region21: #{tpu_custom_call.1} parent=5 // pred_check
        %p171 = pneg %p170
      $region22: #{tpu_custom_call.1} parent=5 // pred_check_branch
        %173 = sbr.rel (%p171) target = $region24
      $region23: #{tpu_custom_call.1} parent=5 // pred_region
        // Predicated region
        $region25: #{tpu_custom_call.1} parent=23 // pred_check
          %p174 = pneg %p48
        $region26: #{tpu_custom_call.1} parent=23 // pred_check_branch
          %176 = sbr.rel (%p174) target = $region28
        $region27: #{tpu_custom_call.1} parent=23 // pred_region
          %s177 = sand.u32 %s38, 1
          %s178 = scalar_lea.sflag [#allocation3], %s177
          %s179 = sand.u32 %s38, 1
          %s180 = smul.addr %s179, 128
          %s181 = scalar_lea.vmem [#allocation2], %s180
          %s182 = smul.u32 32, %s23
          %s184 = ssub.s32 2048, 2048
          %185 = vsyncadd %s178, %s184
          %s186 = smul.addr %s182, 64
          %s187 = scalar_lea.hbm %s0, %s186
          %s188 = sshll.u32 %s181, 4
          %s189 = int_to_ptr.vmem [resolvable:$true] %s188
          %194 = dma.hbm_to_vmem [thread:$0]  %s187, 2048, %s189, %s178, 64, 64, 4
        $region28: #{tpu_custom_call.1} parent=23 // pred_fallthru
          _
      $region24: #{tpu_custom_call.1} parent=5 // pred_fallthru
        _
      %p195 = scmp.le.s32.totalorder 1, %s16
      %p196 = scmp.lt.s32.totalorder %s16, 3
      %p197 = pnand %p195, %p196
      %p198 = pneg %p197
      // Predicated region
      $region29: #{tpu_custom_call.1} parent=5 // pred_check
        _
      $region30: #{tpu_custom_call.1} parent=5 // pred_check_branch
        %200 = sbr.rel (%p197) target = $region32
      $region31: #{tpu_custom_call.1} parent=5 // pred_region
        %s201 = ssub.s32 %s16, 1
        %s202 = sand.u32 %s41, 1
        %s203 = scalar_lea.sflag [#allocation3], %s202
        %s204 = sand.u32 %s41, 1
        %s205 = smul.addr %s204, 128
        %s206 = scalar_lea.vmem [#allocation2], %s205
        // Predicated region
        $region33: #{tpu_custom_call.1} parent=31 // pred_check
          %p207 = pneg %p54
        $region34: #{tpu_custom_call.1} parent=31 // pred_check_branch
          %209 = sbr.rel (%p207) target = $region36
        $region35: #{tpu_custom_call.1} parent=31 // pred_region
          %210 = dma.done %s203, 2048
        $region36: #{tpu_custom_call.1} parent=31 // pred_fallthru
          _
        // Predicated region
        $region37: #{tpu_custom_call.1} parent=31 // pred_check
          %p211 = pneg %p80
        $region38: #{tpu_custom_call.1} parent=31 // pred_check_branch
          %213 = sbr.rel (%p211) target = $region40
        $region39: #{tpu_custom_call.1} parent=31 // pred_region
          %214 = dma.done [#allocation6], 1024
        $region40: #{tpu_custom_call.1} parent=31 // pred_fallthru
          _
        %s215 = sand.u32 %s41, 1
        %s216 = scalar_lea.sflag [#allocation3], %s215
        %s217 = sand.u32 %s41, 1
        %s218 = smul.addr %s217, 128
        %s219 = scalar_lea.vmem [#allocation2], %s218
        %p220 = pneg %p54
        %p221 = pneg %p51
        %p222 = pneg %p80
        %p223 = pneg %p77
        %p224 = scmp.lt.s32.totalorder %s26, 0
        %s225 = scalar_select %p224, %s26, 0
        %s226 = scalar_lea.vmem %s2, %s225
        %p227 = pneg %p106
        %p228 = pneg %p103
        %p229 = pneg %p134
        %p230 = pneg %p131
        %s231 = sand.u32 %s121, 1
        %s232 = scalar_lea.sflag [#allocation4], %s231
        %s233 = sand.u32 %s121, 1
        %s234 = smul.addr %s233, 128
        %s235 = scalar_lea.vmem [#allocation7], %s234
        %s236 = smul.u32 32, %s25
        %p237 = scmp.lt.s32.totalorder %s26, 0
        %s238 = scalar_select %p237, %s26, 0
        %s239 = scalar_lea.vmem %s2, %s238
        %s240 = smul.u32 32, %s25
        %v242 = vld [vmem:[%s206] sm:$0xf]
        %v243 = vld [vmem:[%s206 + $0x4] sm:$0xf]
        %v244 = vld [vmem:[%s206 + $0x8] sm:$0xf]
        %v245 = vld [vmem:[%s206 + $0xc] sm:$0xf]
        %v246 = vld [vmem:[%s206 + $0x10] sm:$0xf]
        %v247 = vld [vmem:[%s206 + $0x14] sm:$0xf]
        %v248 = vld [vmem:[%s206 + $0x18] sm:$0xf]
        %v249 = vld [vmem:[%s206 + $0x1c] sm:$0xf]
        %v250 = vld [vmem:[%s206 + $0x20] sm:$0xf]
        %v251 = vld [vmem:[%s206 + $0x24] sm:$0xf]
        %v252 = vld [vmem:[%s206 + $0x28] sm:$0xf]
        %v253 = vld [vmem:[%s206 + $0x2c] sm:$0xf]
        %v254 = vld [vmem:[%s206 + $0x30] sm:$0xf]
        %v255 = vld [vmem:[%s206 + $0x34] sm:$0xf]
        %v256 = vld [vmem:[%s206 + $0x38] sm:$0xf]
        %v257 = vld [vmem:[%s206 + $0x3c] sm:$0xf]
        %v258 = vld [vmem:[%s206 + $0x40] sm:$0xf]
        %v259 = vld [vmem:[%s206 + $0x44] sm:$0xf]
        %v260 = vld [vmem:[%s206 + $0x48] sm:$0xf]
        %v261 = vld [vmem:[%s206 + $0x4c] sm:$0xf]
        %v262 = vld [vmem:[%s206 + $0x50] sm:$0xf]
        %v263 = vld [vmem:[%s206 + $0x54] sm:$0xf]
        %v264 = vld [vmem:[%s206 + $0x58] sm:$0xf]
        %v265 = vld [vmem:[%s206 + $0x5c] sm:$0xf]
        %v266 = vld [vmem:[%s206 + $0x60] sm:$0xf]
        %v267 = vld [vmem:[%s206 + $0x64] sm:$0xf]
        %v268 = vld [vmem:[%s206 + $0x68] sm:$0xf]
        %v269 = vld [vmem:[%s206 + $0x6c] sm:$0xf]
        %v270 = vld [vmem:[%s206 + $0x70] sm:$0xf]
        %v271 = vld [vmem:[%s206 + $0x74] sm:$0xf]
        %v272 = vld [vmem:[%s206 + $0x78] sm:$0xf]
        %v273 = vld [vmem:[%s206 + $0x7c] sm:$0xf]
        %v274 = vld [vmem:[#allocation5] sm:$0xf]
        %v275 = vld [vmem:[#allocation5 + $0x4] sm:$0xf]
        %v276 = vld [vmem:[#allocation5 + $0x8] sm:$0xf]
        %v277 = vld [vmem:[#allocation5 + $0xc] sm:$0xf]
        %v278 = vld [vmem:[#allocation5 + $0x10] sm:$0xf]
        %v279 = vld [vmem:[#allocation5 + $0x14] sm:$0xf]
        %v280 = vld [vmem:[#allocation5 + $0x18] sm:$0xf]
        %v281 = vld [vmem:[#allocation5 + $0x1c] sm:$0xf]
        %v282 = vld [vmem:[#allocation5 + $0x20] sm:$0xf]
        %v283 = vld [vmem:[#allocation5 + $0x24] sm:$0xf]
        %v284 = vld [vmem:[#allocation5 + $0x28] sm:$0xf]
        %v285 = vld [vmem:[#allocation5 + $0x2c] sm:$0xf]
        %v286 = vld [vmem:[#allocation5 + $0x30] sm:$0xf]
        %v287 = vld [vmem:[#allocation5 + $0x34] sm:$0xf]
        %v288 = vld [vmem:[#allocation5 + $0x38] sm:$0xf]
        %v289 = vld [vmem:[#allocation5 + $0x3c] sm:$0xf]
        %v290 = vld [vmem:[%s239] sm:$0x1]
        %v292 = vlaneseq
        %v293 = vshrl.u32 %v292, 7
        %v294 = vsub.s32 0, %v293
        %v295 = vrot.slane %v290, %v294
        %v329 = vunpack.c.l.b16 %v242
        %v330 = vunpack.c.l.b16 %v243
        %v331 = vunpack.c.l.b16 %v244
        %v332 = vunpack.c.l.b16 %v245
        %v333 = vunpack.c.l.b16 %v246
        %v334 = vunpack.c.l.b16 %v247
        %v335 = vunpack.c.l.b16 %v248
        %v336 = vunpack.c.l.b16 %v249
        %v337 = vunpack.c.l.b16 %v250
        %v338 = vunpack.c.l.b16 %v251
        %v339 = vunpack.c.l.b16 %v252
        %v340 = vunpack.c.l.b16 %v253
        %v341 = vunpack.c.l.b16 %v254
        %v342 = vunpack.c.l.b16 %v255
        %v343 = vunpack.c.l.b16 %v256
        %v344 = vunpack.c.l.b16 %v257
        %v345 = vunpack.c.l.b16 %v258
        %v346 = vunpack.c.l.b16 %v259
        %v347 = vunpack.c.l.b16 %v260
        %v348 = vunpack.c.l.b16 %v261
        %v349 = vunpack.c.l.b16 %v262
        %v350 = vunpack.c.l.b16 %v263
        %v351 = vunpack.c.l.b16 %v264
        %v352 = vunpack.c.l.b16 %v265
        %v353 = vunpack.c.l.b16 %v266
        %v354 = vunpack.c.l.b16 %v267
        %v355 = vunpack.c.l.b16 %v268
        %v356 = vunpack.c.l.b16 %v269
        %v357 = vunpack.c.l.b16 %v270
        %v358 = vunpack.c.l.b16 %v271
        %v359 = vunpack.c.l.b16 %v272
        %v360 = vunpack.c.l.b16 %v273
        %v361 = vpack.c.b16 %v330, %v329
        %v362 = vpack.c.b16 %v332, %v331
        %v363 = vpack.c.b16 %v334, %v333
        %v364 = vpack.c.b16 %v336, %v335
        %v365 = vpack.c.b16 %v338, %v337
        %v366 = vpack.c.b16 %v340, %v339
        %v367 = vpack.c.b16 %v342, %v341
        %v368 = vpack.c.b16 %v344, %v343
        %v369 = vpack.c.b16 %v346, %v345
        %v370 = vpack.c.b16 %v348, %v347
        %v371 = vpack.c.b16 %v350, %v349
        %v372 = vpack.c.b16 %v352, %v351
        %v373 = vpack.c.b16 %v354, %v353
        %v374 = vpack.c.b16 %v356, %v355
        %v375 = vpack.c.b16 %v358, %v357
        %v376 = vpack.c.b16 %v360, %v359
        %v409 = vunpack.c.l.b16 %v274
        %v410 = vunpack.c.l.b16 %v275
        %v411 = vunpack.c.l.b16 %v276
        %v412 = vunpack.c.l.b16 %v277
        %v413 = vunpack.c.l.b16 %v278
        %v414 = vunpack.c.l.b16 %v279
        %v415 = vunpack.c.l.b16 %v280
        %v416 = vunpack.c.l.b16 %v281
        %v417 = vunpack.c.l.b16 %v282
        %v418 = vunpack.c.l.b16 %v283
        %v419 = vunpack.c.l.b16 %v284
        %v420 = vunpack.c.l.b16 %v285
        %v421 = vunpack.c.l.b16 %v286
        %v422 = vunpack.c.l.b16 %v287
        %v423 = vunpack.c.l.b16 %v288
        %v424 = vunpack.c.l.b16 %v289
        %v425 = vpack.c.b16 %v410, %v409
        %v426 = vpack.c.b16 %v412, %v411
        %v427 = vpack.c.b16 %v414, %v413
        %v428 = vpack.c.b16 %v416, %v415
        %v429 = vpack.c.b16 %v418, %v417
        %v430 = vpack.c.b16 %v420, %v419
        %v431 = vpack.c.b16 %v422, %v421
        %v432 = vpack.c.b16 %v424, %v423
        %441 = vmatprep.subr.bf16.mxu0 0
        %442 = vmatpush1.bf16.msra.mxu0 %v425
        %443 = vmatprep.subr.bf16.mxu0 0
        %444 = vmatpush1.bf16.msra.mxu0 %v426
        %445 = vmatprep.subr.bf16.mxu0 0
        %446 = vmatpush1.bf16.msra.mxu0 %v427
        %447 = vmatprep.subr.bf16.mxu0 0
        %448 = vmatpush1.bf16.msra.mxu0 %v428
        %449 = vmatprep.subr.bf16.mxu0 0
        %450 = vmatpush1.bf16.msra.mxu0 %v429
        %451 = vmatprep.subr.bf16.mxu0 0
        %452 = vmatpush1.bf16.msra.mxu0 %v430
        %453 = vmatprep.subr.bf16.mxu0 0
        %454 = vmatpush1.bf16.msra.mxu0 %v431
        %455 = vmatprep.subr.bf16.mxu0 0
        %456 = vmatpush1.bf16.msra.mxu0 %v432
        %457 = vmatprep.subr.bf16.mxu0 0
        %458 = vmatpush1.bf16.msra.mxu0 0
        %459 = vmatprep.subr.bf16.mxu0 0
        %460 = vmatpush1.bf16.msra.mxu0 0
        %461 = vmatprep.subr.bf16.mxu0 0
        %462 = vmatpush1.bf16.msra.mxu0 0
        %463 = vmatprep.subr.bf16.mxu0 0
        %464 = vmatpush1.bf16.msra.mxu0 0
        %465 = vmatprep.subr.bf16.mxu0 0
        %466 = vmatpush1.bf16.msra.mxu0 0
        %467 = vmatprep.subr.bf16.mxu0 0
        %468 = vmatpush1.bf16.msra.mxu0 0
        %469 = vmatprep.subr.bf16.mxu0 0
        %470 = vmatpush1.bf16.msra.mxu0 0
        %471 = vmatprep.subr.bf16.mxu0 0
        %472 = vmatpush1.bf16.msra.mxu0 0
        %473 = vmatprep.mubr.bf16.mxu0 0
        %474 = vmatmul.mubr.bf16.gmra.mrb[0].mxu0 %v361
        %v475 = vpop.f32.mrb[0].mxu0
        %v476 = vadd.f32 %v295, %v475
        %v477 = vpop.f32.mrb[0].mxu0
        %v478 = vpop.f32.mrb[0].mxu0
        %v479 = vadd.f32 %v295, %v478
        %v480 = vpop.f32.mrb[0].mxu0
        %481 = vmatprep.mubr.bf16.mxu0 0
        %482 = vmatmul.mubr.bf16.gmra.mrb[0].mxu0 %v362
        %v483 = vpop.f32.mrb[0].mxu0
        %v484 = vadd.f32 %v295, %v483
        %v485 = vpop.f32.mrb[0].mxu0
        %v486 = vpop.f32.mrb[0].mxu0
        %v487 = vadd.f32 %v295, %v486
        %v488 = vpop.f32.mrb[0].mxu0
        %489 = vmatprep.mubr.bf16.mxu0 0
        %490 = vmatmul.mubr.bf16.gmra.mrb[0].mxu0 %v363
        %v491 = vpop.f32.mrb[0].mxu0
        %v492 = vadd.f32 %v295, %v491
        %v493 = vpop.f32.mrb[0].mxu0
        %v494 = vpop.f32.mrb[0].mxu0
        %v495 = vadd.f32 %v295, %v494
        %v496 = vpop.f32.mrb[0].mxu0
        %497 = vmatprep.mubr.bf16.mxu0 0
        %498 = vmatmul.mubr.bf16.gmra.mrb[0].mxu0 %v364
        %v499 = vpop.f32.mrb[0].mxu0
        %v500 = vadd.f32 %v295, %v499
        %v501 = vpop.f32.mrb[0].mxu0
        %v502 = vpop.f32.mrb[0].mxu0
        %v503 = vadd.f32 %v295, %v502
        %v504 = vpop.f32.mrb[0].mxu0
        %505 = vmatprep.mubr.bf16.mxu0 0
        %506 = vmatmul.mubr.bf16.gmra.mrb[0].mxu0 %v365
        %v507 = vpop.f32.mrb[0].mxu0
        %v508 = vadd.f32 %v295, %v507
        %v509 = vpop.f32.mrb[0].mxu0
        %v510 = vpop.f32.mrb[0].mxu0
        %v511 = vadd.f32 %v295, %v510
        %v512 = vpop.f32.mrb[0].mxu0
        %513 = vmatprep.mubr.bf16.mxu0 0
        %514 = vmatmul.mubr.bf16.gmra.mrb[0].mxu0 %v366
        %v515 = vpop.f32.mrb[0].mxu0
        %v516 = vadd.f32 %v295, %v515
        %v517 = vpop.f32.mrb[0].mxu0
        %v518 = vpop.f32.mrb[0].mxu0
        %v519 = vadd.f32 %v295, %v518
        %v520 = vpop.f32.mrb[0].mxu0
        %521 = vmatprep.mubr.bf16.mxu0 0
        %522 = vmatmul.mubr.bf16.gmra.mrb[0].mxu0 %v367
        %v523 = vpop.f32.mrb[0].mxu0
        %v524 = vadd.f32 %v295, %v523
        %v525 = vpop.f32.mrb[0].mxu0
        %v526 = vpop.f32.mrb[0].mxu0
        %v527 = vadd.f32 %v295, %v526
        %v528 = vpop.f32.mrb[0].mxu0
        %529 = vmatprep.mubr.bf16.mxu0 0
        %530 = vmatmul.mubr.bf16.gmra.mrb[0].mxu0 %v368
        %v531 = vpop.f32.mrb[0].mxu0
        %v532 = vadd.f32 %v295, %v531
        %v533 = vpop.f32.mrb[0].mxu0
        %v534 = vpop.f32.mrb[0].mxu0
        %v535 = vadd.f32 %v295, %v534
        %v536 = vpop.f32.mrb[0].mxu0
        %537 = vmatprep.mubr.bf16.mxu0 0
        %538 = vmatmul.mubr.bf16.gmra.mrb[0].mxu0 %v369
        %v539 = vpop.f32.mrb[0].mxu0
        %v540 = vadd.f32 %v295, %v539
        %v541 = vpop.f32.mrb[0].mxu0
        %v542 = vpop.f32.mrb[0].mxu0
        %v543 = vadd.f32 %v295, %v542
        %v544 = vpop.f32.mrb[0].mxu0
        %545 = vmatprep.mubr.bf16.mxu0 0
        %546 = vmatmul.mubr.bf16.gmra.mrb[0].mxu0 %v370
        %v547 = vpop.f32.mrb[0].mxu0
        %v548 = vadd.f32 %v295, %v547
        %v549 = vpop.f32.mrb[0].mxu0
        %v550 = vpop.f32.mrb[0].mxu0
        %v551 = vadd.f32 %v295, %v550
        %v552 = vpop.f32.mrb[0].mxu0
        %553 = vmatprep.mubr.bf16.mxu0 0
        %554 = vmatmul.mubr.bf16.gmra.mrb[0].mxu0 %v371
        %v555 = vpop.f32.mrb[0].mxu0
        %v556 = vadd.f32 %v295, %v555
        %v557 = vpop.f32.mrb[0].mxu0
        %v558 = vpop.f32.mrb[0].mxu0
        %v559 = vadd.f32 %v295, %v558
        %v560 = vpop.f32.mrb[0].mxu0
        %561 = vmatprep.mubr.bf16.mxu0 0
        %562 = vmatmul.mubr.bf16.gmra.mrb[0].mxu0 %v372
        %v563 = vpop.f32.mrb[0].mxu0
        %v564 = vadd.f32 %v295, %v563
        %v565 = vpop.f32.mrb[0].mxu0
        %v566 = vpop.f32.mrb[0].mxu0
        %v567 = vadd.f32 %v295, %v566
        %v568 = vpop.f32.mrb[0].mxu0
        %569 = vmatprep.mubr.bf16.mxu0 0
        %570 = vmatmul.mubr.bf16.gmra.mrb[0].mxu0 %v373
        %v571 = vpop.f32.mrb[0].mxu0
        %v572 = vadd.f32 %v295, %v571
        %v573 = vpop.f32.mrb[0].mxu0
        %v574 = vpop.f32.mrb[0].mxu0
        %v575 = vadd.f32 %v295, %v574
        %v576 = vpop.f32.mrb[0].mxu0
        %577 = vmatprep.mubr.bf16.mxu0 0
        %578 = vmatmul.mubr.bf16.gmra.mrb[0].mxu0 %v374
        %v579 = vpop.f32.mrb[0].mxu0
        %v580 = vadd.f32 %v295, %v579
        %v581 = vpop.f32.mrb[0].mxu0
        %v582 = vpop.f32.mrb[0].mxu0
        %v583 = vadd.f32 %v295, %v582
        %v584 = vpop.f32.mrb[0].mxu0
        %585 = vmatprep.mubr.bf16.mxu0 0
        %586 = vmatmul.mubr.bf16.gmra.mrb[0].mxu0 %v375
        %v587 = vpop.f32.mrb[0].mxu0
        %v588 = vadd.f32 %v295, %v587
        %v589 = vpop.f32.mrb[0].mxu0
        %v590 = vpop.f32.mrb[0].mxu0
        %v591 = vadd.f32 %v295, %v590
        %v592 = vpop.f32.mrb[0].mxu0
        %593 = vmatprep.mubr.bf16.mxu0 0
        %594 = vmatmul.mubr.bf16.gmra.mrb[0].mxu0 %v376
        %v595 = vpop.f32.mrb[0].mxu0
        %v596 = vadd.f32 %v295, %v595
        %v597 = vpop.f32.mrb[0].mxu0
        %v598 = vpop.f32.mrb[0].mxu0
        %v599 = vadd.f32 %v295, %v598
        %v600 = vpop.f32.mrb[0].mxu0
        %601 = vdwg.mxu0
        %v602 = vmax.f32 %v476, 0.0
        %v603 = vmax.f32 %v479, 0.0
        %v604 = vmax.f32 %v484, 0.0
        %v605 = vmax.f32 %v487, 0.0
        %v606 = vmax.f32 %v492, 0.0
        %v607 = vmax.f32 %v495, 0.0
        %v608 = vmax.f32 %v500, 0.0
        %v609 = vmax.f32 %v503, 0.0
        %v610 = vmax.f32 %v508, 0.0
        %v611 = vmax.f32 %v511, 0.0
        %v612 = vmax.f32 %v516, 0.0
        %v613 = vmax.f32 %v519, 0.0
        %v614 = vmax.f32 %v524, 0.0
        %v615 = vmax.f32 %v527, 0.0
        %v616 = vmax.f32 %v532, 0.0
        %v617 = vmax.f32 %v535, 0.0
        %v618 = vmax.f32 %v540, 0.0
        %v619 = vmax.f32 %v543, 0.0
        %v620 = vmax.f32 %v548, 0.0
        %v621 = vmax.f32 %v551, 0.0
        %v622 = vmax.f32 %v556, 0.0
        %v623 = vmax.f32 %v559, 0.0
        %v624 = vmax.f32 %v564, 0.0
        %v625 = vmax.f32 %v567, 0.0
        %v626 = vmax.f32 %v572, 0.0
        %v627 = vmax.f32 %v575, 0.0
        %v628 = vmax.f32 %v580, 0.0
        %v629 = vmax.f32 %v583, 0.0
        %v630 = vmax.f32 %v588, 0.0
        %v631 = vmax.f32 %v591, 0.0
        %v632 = vmax.f32 %v596, 0.0
        %v633 = vmax.f32 %v599, 0.0
        %v634 = vpack.c.bf16 %v603, %v602
        %v635 = vpack.c.bf16 %v605, %v604
        %v636 = vpack.c.bf16 %v607, %v606
        %v637 = vpack.c.bf16 %v609, %v608
        %v638 = vpack.c.bf16 %v611, %v610
        %v639 = vpack.c.bf16 %v613, %v612
        %v640 = vpack.c.bf16 %v615, %v614
        %v641 = vpack.c.bf16 %v617, %v616
        %v642 = vpack.c.bf16 %v619, %v618
        %v643 = vpack.c.bf16 %v621, %v620
        %v644 = vpack.c.bf16 %v623, %v622
        %v645 = vpack.c.bf16 %v625, %v624
        %v646 = vpack.c.bf16 %v627, %v626
        %v647 = vpack.c.bf16 %v629, %v628
        %v648 = vpack.c.bf16 %v631, %v630
        %v649 = vpack.c.bf16 %v633, %v632
        %v666 = vunpack.c.l.b16 %v634
        %v667 = vunpack.c.h.b16 %v634
        %v668 = vunpack.c.l.b16 %v635
        %v669 = vunpack.c.h.b16 %v635
        %v670 = vunpack.c.l.b16 %v636
        %v671 = vunpack.c.h.b16 %v636
        %v672 = vunpack.c.l.b16 %v637
        %v673 = vunpack.c.h.b16 %v637
        %v674 = vunpack.c.l.b16 %v638
        %v675 = vunpack.c.h.b16 %v638
        %v676 = vunpack.c.l.b16 %v639
        %v677 = vunpack.c.h.b16 %v639
        %v678 = vunpack.c.l.b16 %v640
        %v679 = vunpack.c.h.b16 %v640
        %v680 = vunpack.c.l.b16 %v641
        %v681 = vunpack.c.h.b16 %v641
        %v682 = vunpack.c.l.b16 %v642
        %v683 = vunpack.c.h.b16 %v642
        %v684 = vunpack.c.l.b16 %v643
        %v685 = vunpack.c.h.b16 %v643
        %v686 = vunpack.c.l.b16 %v644
        %v687 = vunpack.c.h.b16 %v644
        %v688 = vunpack.c.l.b16 %v645
        %v689 = vunpack.c.h.b16 %v645
        %v690 = vunpack.c.l.b16 %v646
        %v691 = vunpack.c.h.b16 %v646
        %v692 = vunpack.c.l.b16 %v647
        %v693 = vunpack.c.h.b16 %v647
        %v694 = vunpack.c.l.b16 %v648
        %v695 = vunpack.c.h.b16 %v648
        %v696 = vunpack.c.l.b16 %v649
        %v697 = vunpack.c.h.b16 %v649
        %v698 = vpack.c.b16 %v666, %v666
        %v699 = vpack.c.b16 %v667, %v667
        %v700 = vpack.c.b16 %v668, %v668
        %v701 = vpack.c.b16 %v669, %v669
        %v702 = vpack.c.b16 %v670, %v670
        %v703 = vpack.c.b16 %v671, %v671
        %v704 = vpack.c.b16 %v672, %v672
        %v705 = vpack.c.b16 %v673, %v673
        %v706 = vpack.c.b16 %v674, %v674
        %v707 = vpack.c.b16 %v675, %v675
        %v708 = vpack.c.b16 %v676, %v676
        %v709 = vpack.c.b16 %v677, %v677
        %v710 = vpack.c.b16 %v678, %v678
        %v711 = vpack.c.b16 %v679, %v679
        %v712 = vpack.c.b16 %v680, %v680
        %v713 = vpack.c.b16 %v681, %v681
        %v714 = vpack.c.b16 %v682, %v682
        %v715 = vpack.c.b16 %v683, %v683
        %v716 = vpack.c.b16 %v684, %v684
        %v717 = vpack.c.b16 %v685, %v685
        %v718 = vpack.c.b16 %v686, %v686
        %v719 = vpack.c.b16 %v687, %v687
        %v720 = vpack.c.b16 %v688, %v688
        %v721 = vpack.c.b16 %v689, %v689
        %v722 = vpack.c.b16 %v690, %v690
        %v723 = vpack.c.b16 %v691, %v691
        %v724 = vpack.c.b16 %v692, %v692
        %v725 = vpack.c.b16 %v693, %v693
        %v726 = vpack.c.b16 %v694, %v694
        %v727 = vpack.c.b16 %v695, %v695
        %v728 = vpack.c.b16 %v696, %v696
        %v729 = vpack.c.b16 %v697, %v697
        %762 = vst [vmem:[%s235] sm:$0xf] %v698
        %763 = vst [vmem:[%s235 + $0x4] sm:$0xf] %v699
        %764 = vst [vmem:[%s235 + $0x8] sm:$0xf] %v700
        %765 = vst [vmem:[%s235 + $0xc] sm:$0xf] %v701
        %766 = vst [vmem:[%s235 + $0x10] sm:$0xf] %v702
        %767 = vst [vmem:[%s235 + $0x14] sm:$0xf] %v703
        %768 = vst [vmem:[%s235 + $0x18] sm:$0xf] %v704
        %769 = vst [vmem:[%s235 + $0x1c] sm:$0xf] %v705
        %770 = vst [vmem:[%s235 + $0x20] sm:$0xf] %v706
        %771 = vst [vmem:[%s235 + $0x24] sm:$0xf] %v707
        %772 = vst [vmem:[%s235 + $0x28] sm:$0xf] %v708
        %773 = vst [vmem:[%s235 + $0x2c] sm:$0xf] %v709
        %774 = vst [vmem:[%s235 + $0x30] sm:$0xf] %v710
        %775 = vst [vmem:[%s235 + $0x34] sm:$0xf] %v711
        %776 = vst [vmem:[%s235 + $0x38] sm:$0xf] %v712
        %777 = vst [vmem:[%s235 + $0x3c] sm:$0xf] %v713
        %778 = vst [vmem:[%s235 + $0x40] sm:$0xf] %v714
        %779 = vst [vmem:[%s235 + $0x44] sm:$0xf] %v715
        %780 = vst [vmem:[%s235 + $0x48] sm:$0xf] %v716
        %781 = vst [vmem:[%s235 + $0x4c] sm:$0xf] %v717
        %782 = vst [vmem:[%s235 + $0x50] sm:$0xf] %v718
        %783 = vst [vmem:[%s235 + $0x54] sm:$0xf] %v719
        %784 = vst [vmem:[%s235 + $0x58] sm:$0xf] %v720
        %785 = vst [vmem:[%s235 + $0x5c] sm:$0xf] %v721
        %786 = vst [vmem:[%s235 + $0x60] sm:$0xf] %v722
        %787 = vst [vmem:[%s235 + $0x64] sm:$0xf] %v723
        %788 = vst [vmem:[%s235 + $0x68] sm:$0xf] %v724
        %789 = vst [vmem:[%s235 + $0x6c] sm:$0xf] %v725
        %790 = vst [vmem:[%s235 + $0x70] sm:$0xf] %v726
        %791 = vst [vmem:[%s235 + $0x74] sm:$0xf] %v727
        %792 = vst [vmem:[%s235 + $0x78] sm:$0xf] %v728
        %793 = vst [vmem:[%s235 + $0x7c] sm:$0xf] %v729
        %s794 = sand.u32 %s121, 1
        %s795 = scalar_lea.sflag [#allocation4], %s794
        %s796 = sand.u32 %s121, 1
        %s797 = smul.addr %s796, 128
        %s798 = scalar_lea.vmem [#allocation7], %s797
        // Predicated region
        $region41: #{tpu_custom_call.1} parent=31 // pred_check
          %p799 = pneg %p131
        $region42: #{tpu_custom_call.1} parent=31 // pred_check_branch
          %801 = sbr.rel (%p799) target = $region44
        $region43: #{tpu_custom_call.1} parent=31 // pred_region
          %s802 = smul.u32 32, %s25
          %s804 = ssub.s32 2048, 2048
          %805 = vsyncadd %s795, %s804
          %s806 = sadd.s32 %s26, %s802
          %s807 = smul.addr %s806, 64
          %s808 = scalar_lea.hbm %s3, %s807
          %s809 = sshll.u32 %s798, 4
          %s810 = int_to_ptr.vmem [resolvable:$true] %s809
          %815 = dma.vmem_to_hbm [thread:$0]  %s810, 2048, %s808, %s795, 64, 64, 4
        $region44: #{tpu_custom_call.1} parent=31 // pred_fallthru
          _
      $region32: #{tpu_custom_call.1} parent=5 // pred_fallthru
        _
      %p816 = scmp.le.s32.totalorder 2, %s16
      // Predicated region
      $region45: #{tpu_custom_call.1} parent=5 // pred_check
        %p817 = pneg %p816
      $region46: #{tpu_custom_call.1} parent=5 // pred_check_branch
        %819 = sbr.rel (%p817) target = $region48
      $region47: #{tpu_custom_call.1} parent=5 // pred_region
        %s820 = ssub.s32 %s16, 2
        // Predicated region
        $region49: #{tpu_custom_call.1} parent=47 // pred_check
          %p821 = pneg %p137
        $region50: #{tpu_custom_call.1} parent=47 // pred_check_branch
          %823 = sbr.rel (%p821) target = $region52
        $region51: #{tpu_custom_call.1} parent=47 // pred_region
          %s824 = sand.u32 %s122, 1
          %s825 = scalar_lea.sflag [#allocation4], %s824
          %s826 = sand.u32 %s122, 1
          %s827 = smul.addr %s826, 128
          %s828 = scalar_lea.vmem [#allocation7], %s827
          %829 = dma.done %s825, 2048
        $region52: #{tpu_custom_call.1} parent=47 // pred_fallthru
          _
      $region48: #{tpu_custom_call.1} parent=5 // pred_fallthru
        _
    $region6: #{tpu_custom_call.1} parent=1 // loop_footer
      %s20 = sadd.s32 1, %s16
    $region7: #{tpu_custom_call.1} parent=1 // loop_footer_branch
      %15 = sbr.rel target = $region3
    $region8: #{tpu_custom_call.1} parent=1 // loop_exit
      _
    %830 = vsyncpa [#allocation3], 1
    %s831 = scalar_lea.sflag [#allocation3], 1
    %832 = vsyncpa %s831, 1
    %833 = vsyncpa [#allocation6], 1
    %834 = vsyncpa [#allocation4], 1
    %s835 = scalar_lea.sflag [#allocation4], 1
    %836 = vsyncpa %s835, 1

</llo_original>
